<compile_context>
chip_gen: v7x
topology: tpu7x:2x2x1
jax: 0.10.0
libtpu: 0.0.40
codegen_flags: <defaults>
</compile_context>

<pallas_src>
import functools
import math

import jax
import jax.numpy as jnp
from jax import lax
from jax.experimental import pallas as pl
from jax.experimental.pallas import tpu as pltpu


# ----------------------------------------------------------------------------
# Small helpers
# ----------------------------------------------------------------------------
def _round_up(x, m):
    return ((x + m - 1) // m) * m


@functools.lru_cache(maxsize=None)
def _vmem_limit_bytes():
    """Per-generation scoped-VMEM budget (~half of physical, capped at 96 MiB)."""
    try:
        phys = int(pltpu.get_tpu_info().vmem_capacity_bytes)
    except Exception:
        phys = 64 * 1024 * 1024          # conservative fallback (v7x-sized)
    return max(16 * 1024 * 1024, min(phys // 2, 96 * 1024 * 1024))


def _compiler_params(dim_sem):
    return pltpu.CompilerParams(dimension_semantics=dim_sem,
                                vmem_limit_bytes=_vmem_limit_bytes())


def _choose_tile_rows(n_rows, max_tile, target_steps=4):
    """Row tile: multiple of 8, <= max_tile, aiming for >= target_steps grid steps."""
    max_tile = max(8, _round_up(max_tile, 8))
    n8 = _round_up(max(n_rows, 1), 8)
    tile = _round_up(-(-n8 // target_steps), 8)
    tile = max(8, min(tile, max_tile, n8))
    while n8 % tile:                      # keep every tile full (no ragged last tile)
        tile -= 8
    return tile


def _pad_rows(x2d, tile):
    """Zero-pad rows to a multiple of `tile` (all row math is per-row => safe)."""
    m = x2d.shape[0]
    m_pad = _round_up(m, tile)
    if m_pad != m:
        x2d = jnp.pad(x2d, ((0, m_pad - m), (0, 0)))
    return x2d, m


def _attn_tiles(s, max_q=256, max_kv=512):
    """q/kv tile sizes that divide S exactly (no KV padding => no masking needed)."""
    if s % 8 != 0:
        return s, s                       # ragged S: full-extent blocks are allowed

    def largest_divisor(mx):
        best, t = 8, 8
        while t <= min(s, mx):
            if s % t == 0:
                best = t
            t += 8
        return best

    return largest_divisor(max_q), largest_divisor(max_kv)


def _layernorm_rows(x, alpha, beta, eps, d_model):
    """Torch-style LayerNorm: scalar alpha/beta, unbiased std, eps added to std."""
    mean = jnp.sum(x, axis=-1, keepdims=True) * jnp.float32(1.0 / d_model)
    diff = x - mean
    var = jnp.sum(diff * diff, axis=-1, keepdims=True) * jnp.float32(1.0 / (d_model - 1))
    std = jnp.sqrt(var)
    scale = alpha * pl.reciprocal(std + jnp.float32(eps), approx=True)
    return diff * scale + beta


# ----------------------------------------------------------------------------
# Kernel 1: LN1 fused into a single QKV projection  (one matmul, (d, 3d) weight)
# ----------------------------------------------------------------------------
def _ln_qkv_kernel(alpha_ref, beta_ref, x_ref, w_ref, b_ref, qkv_ref, *, eps, d_model):
    x = x_ref[...].astype(jnp.float32)
    ln = _layernorm_rows(x, alpha_ref[0, 0], beta_ref[0, 0], eps, d_model)
    y = jnp.dot(ln.astype(w_ref.dtype), w_ref[...],
                preferred_element_type=jnp.float32)
    qkv_ref[...] = (y + b_ref[...]).astype(qkv_ref.dtype)


def ln_qkv_pallas(x2d, alpha, beta, wqkv_bf16, bqkv, *, eps=1e-6, max_tile_m=512):
    m, d = x2d.shape
    n3 = wqkv_bf16.shape[1]
    tile_m = _choose_tile_rows(m, max_tile_m)
    x_p, m_orig = _pad_rows(x2d, tile_m)
    m_pad = x_p.shape[0]

    a2 = jnp.asarray(alpha, jnp.float32).reshape(1, 1)
    be2 = jnp.asarray(beta, jnp.float32).reshape(1, 1)

    kernel = functools.partial(_ln_qkv_kernel, eps=eps, d_model=d)
    out = pl.pallas_call(
        kernel,
        out_shape=jax.ShapeDtypeStruct((m_pad, n3), jnp.bfloat16),
        grid_spec=pltpu.PrefetchScalarGridSpec(
            num_scalar_prefetch=0,
            grid=(m_pad // tile_m,),
            in_specs=[
                pl.BlockSpec(memory_space=pltpu.SMEM),          # alpha (1,1)
                pl.BlockSpec(memory_space=pltpu.SMEM),          # beta  (1,1)
                pl.BlockSpec((tile_m, d), lambda i: (i, 0)),    # x rows
                pl.BlockSpec((d, n3), lambda i: (0, 0)),        # fused W_qkv (resident)
                pl.BlockSpec((1, n3), lambda i: (0, 0)),        # fused bias
            ],
            out_specs=pl.BlockSpec((tile_m, n3), lambda i: (i, 0)),
        ),
        compiler_params=_compiler_params(("parallel",)),
    )(a2, be2, x_p, wqkv_bf16, bqkv.reshape(1, -1))
    return out[:m_orig]


# ----------------------------------------------------------------------------
# Kernel 2: flash-style attention (online softmax, heads packed along lanes)
# ----------------------------------------------------------------------------
def _flash_attn_kernel(q_ref, k_ref, v_ref, o_ref, m_ref, l_ref, acc_ref, *, h, dk):
    kv_idx = pl.program_id(2)

    @pl.when(kv_idx == 0)
    def _():
        m_ref[...] = jnp.full_like(m_ref, -jnp.inf)
        l_ref[...] = jnp.zeros_like(l_ref)
        acc_ref[...] = jnp.zeros_like(acc_ref)

    # NOTE: the reference's masked_fill result is discarded => mask is a no-op.
    q = q_ref[0]        # (tq, h*dk)  bf16; 1/sqrt(dk) already folded into W_q/b_q
    k = k_ref[0]        # (tkv, h*dk) bf16
    v = v_ref[0]        # (tkv, h*dk) bf16
    dims = (((1,), (1,)), ((), ()))            # contract the dk axis (Q @ K^T)

    for i in range(h):                          # heads: static lane slices of width dk
        sl = slice(i * dk, (i + 1) * dk)
        s = lax.dot_general(q[:, sl], k[:, sl], dims,
                            preferred_element_type=jnp.float32)      # (tq, tkv) f32
        m_prev = m_ref[i]                                             # (tq, 1)
        m_new = jnp.maximum(m_prev, jnp.max(s, axis=-1, keepdims=True))
        corr = jnp.exp(m_prev - m_new)
        p = jnp.exp(s - m_new)
        l_ref[i] = corr * l_ref[i] + jnp.sum(p, axis=-1, keepdims=True)
        m_ref[i] = m_new
        pv = jnp.dot(p.astype(v.dtype), v[:, sl],
                     preferred_element_type=jnp.float32)              # (tq, dk) f32
        acc_ref[:, sl] = corr * acc_ref[:, sl] + pv

    @pl.when(kv_idx == pl.num_programs(2) - 1)
    def _():
        for i in range(h):
            sl = slice(i * dk, (i + 1) * dk)
            acc_ref[:, sl] = acc_ref[:, sl] * pl.reciprocal(l_ref[i], approx=True)
        o_ref[0] = acc_ref[...].astype(o_ref.dtype)    # single lane-dense store


def flash_attention_pallas(qkv, *, h, dk, max_q_tile=256, max_kv_tile=512,
                           out_dtype=jnp.bfloat16):
    """qkv: (B, S, 3*D) with D = h*dk, columns ordered [Q | K | V], heads in lanes."""
    b, s, n3 = qkv.shape
    d = h * dk
    assert n3 == 3 * d, "qkv last dim must be 3 * h * dk"
    tq, tkv = _attn_tiles(s, max_q_tile, max_kv_tile)

    q_spec = pl.BlockSpec((1, tq, d), lambda bi, qi, ki: (bi, qi, 0))
    k_spec = pl.BlockSpec((1, tkv, d), lambda bi, qi, ki: (bi, ki, 1))
    v_spec = pl.BlockSpec((1, tkv, d), lambda bi, qi, ki: (bi, ki, 2))
    o_spec = pl.BlockSpec((1, tq, d), lambda bi, qi, ki: (bi, qi, 0))

    kernel = functools.partial(_flash_attn_kernel, h=h, dk=dk)
    return pl.pallas_call(
        kernel,
        out_shape=jax.ShapeDtypeStruct((b, s, d), out_dtype),
        grid_spec=pltpu.PrefetchScalarGridSpec(
            num_scalar_prefetch=0,
            grid=(b, s // tq, s // tkv),
            in_specs=[q_spec, k_spec, v_spec],
            out_specs=o_spec,
            scratch_shapes=[
                pltpu.VMEM((h, tq, 1), jnp.float32),   # running max m
                pltpu.VMEM((h, tq, 1), jnp.float32),   # running sum l
                pltpu.VMEM((tq, d), jnp.float32),      # output accumulator
            ],
        ),
        compiler_params=_compiler_params(("parallel", "parallel", "arbitrary")),
    )(qkv, qkv, qkv)   # same array, three views (Q / K / V column blocks)


# ----------------------------------------------------------------------------
# Kernel 3: output projection  w_o(attn) + bias + residual   (residual fused)
# ----------------------------------------------------------------------------
def _out_proj_residual_kernel(a_ref, w_ref, b_ref, r_ref, o_ref):
    y = jnp.dot(a_ref[...], w_ref[...], preferred_element_type=jnp.float32)
    o_ref[...] = (y + b_ref[...] + r_ref[...].astype(jnp.float32)).astype(o_ref.dtype)


def linear_residual_pallas(x2d, w_bf16, b, residual, *, max_tile_m=512):
    m, kdim = x2d.shape
    n = w_bf16.shape[1]
    tile_m = _choose_tile_rows(m, max_tile_m)
    x_p, m_orig = _pad_rows(x2d, tile_m)
    r_p, _ = _pad_rows(residual, tile_m)
    m_pad = x_p.shape[0]
    out = pl.pallas_call(
        _out_proj_residual_kernel,
        out_shape=jax.ShapeDtypeStruct((m_pad, n), residual.dtype),
        grid_spec=pltpu.PrefetchScalarGridSpec(
            num_scalar_prefetch=0,
            grid=(m_pad // tile_m,),
            in_specs=[
                pl.BlockSpec((tile_m, kdim), lambda i: (i, 0)),   # attention output (bf16)
                pl.BlockSpec((kdim, n), lambda i: (0, 0)),        # W_o (bf16, resident)
                pl.BlockSpec((1, n), lambda i: (0, 0)),           # bias (f32)
                pl.BlockSpec((tile_m, n), lambda i: (i, 0)),      # residual (f32)
            ],
            out_specs=pl.BlockSpec((tile_m, n), lambda i: (i, 0)),
        ),
        compiler_params=_compiler_params(("parallel",)),
    )(x_p, w_bf16, b.reshape(1, -1), r_p)
    return out[:m_orig]


# ----------------------------------------------------------------------------
# Kernel 4: entire FFN sublayer fused:  x + ( relu(LN2(x) W1 + b1) W2 + b2 )
# ----------------------------------------------------------------------------
def _ln_ffn_residual_kernel(alpha_ref, beta_ref, x_ref, w1_ref, b1_ref,
                            w2_ref, b2_ref, o_ref, *, eps, d_model):
    x = x_ref[...].astype(jnp.float32)
    ln = _layernorm_rows(x, alpha_ref[0, 0], beta_ref[0, 0], eps, d_model)
    hid = jnp.dot(ln.astype(w1_ref.dtype), w1_ref[...],
                  preferred_element_type=jnp.float32)
    hid = jnp.maximum(hid + b1_ref[...], 0.0)
    y = jnp.dot(hid.astype(w2_ref.dtype), w2_ref[...],
                preferred_element_type=jnp.float32)
    o_ref[...] = (x + y + b2_ref[...]).astype(o_ref.dtype)


def ln_ffn_residual_pallas(x2d, alpha, beta, w1_bf16, b1, w2_bf16, b2, *,
                           eps=1e-6, max_tile_m=512):
    m, d = x2d.shape
    dff = w1_bf16.shape[1]
    tile_m = _choose_tile_rows(m, max_tile_m)
    x_p, m_orig = _pad_rows(x2d, tile_m)
    m_pad = x_p.shape[0]

    a2 = jnp.asarray(alpha, jnp.float32).reshape(1, 1)
    be2 = jnp.asarray(beta, jnp.float32).reshape(1, 1)

    kernel = functools.partial(_ln_ffn_residual_kernel, eps=eps, d_model=d)
    out = pl.pallas_call(
        kernel,
        out_shape=jax.ShapeDtypeStruct((m_pad, d), x2d.dtype),
        grid_spec=pltpu.PrefetchScalarGridSpec(
            num_scalar_prefetch=0,
            grid=(m_pad // tile_m,),
            in_specs=[
                pl.BlockSpec(memory_space=pltpu.SMEM),           # alpha (1,1)
                pl.BlockSpec(memory_space=pltpu.SMEM),           # beta  (1,1)
                pl.BlockSpec((tile_m, d), lambda i: (i, 0)),     # x rows (residual + LN)
                pl.BlockSpec((d, dff), lambda i: (0, 0)),        # W1 (bf16, resident)
                pl.BlockSpec((1, dff), lambda i: (0, 0)),        # b1
                pl.BlockSpec((dff, d), lambda i: (0, 0)),        # W2 (bf16, resident)
                pl.BlockSpec((1, d), lambda i: (0, 0)),          # b2
            ],
            out_specs=pl.BlockSpec((tile_m, d), lambda i: (i, 0)),
        ),
        compiler_params=_compiler_params(("parallel",)),
    )(a2, be2, x_p, w1_bf16, b1.reshape(1, -1), w2_bf16, b2.reshape(1, -1))
    return out[:m_orig]


# ----------------------------------------------------------------------------
# EncoderBLock forward (pre-LN attention sublayer + pre-LN FFN sublayer)
# ----------------------------------------------------------------------------
def encoder_block_forward(x, src_mask, params, *, eps=1e-6):
    # TODO(synk): Dropout layers are identity here (inference / eval mode).
    # TODO(synk): src_mask is accepted but unused because the reference's
    #             `masked_fill` result is discarded (mask is a forward no-op).
    del src_mask
    B, S, D = x.shape
    H = params["h"]
    assert D % H == 0, "d_model is not divisible by h"
    Dk = D // H
    x2d = x.reshape(B * S, D)

    # Fused QKV weight (d, 3d). 1/sqrt(Dk) is folded into the Q columns so the
    # attention kernel never runs a scale pass over the score matrix.
    scale = 1.0 / math.sqrt(Dk)
    wqkv = jnp.concatenate(
        [params["wq"] * scale, params["wk"], params["wv"]], axis=1).astype(jnp.bfloat16)
    bqkv = jnp.concatenate(
        [params["bq"] * scale, params["bk"], params["bv"]], axis=0)          # f32

    # --- Sublayer 1: LN1 -> fused QKV -> flash attention -> w_o (+ residual).
    qkv2d = ln_qkv_pallas(x2d, params["ln1_alpha"], params["ln1_beta"],
                          wqkv, bqkv, eps=eps)
    qkv = qkv2d.reshape(B, S, 3 * D)            # free reshape; heads stay in lanes

    attn = flash_attention_pallas(qkv, h=H, dk=Dk)          # (B, S, D) bf16
    x1_2d = linear_residual_pallas(attn.reshape(B * S, D),
                                   params["wo"].astype(jnp.bfloat16),
                                   params["bo"], residual=x2d)

    # --- Sublayer 2: FFN fully fused (LN2 + linear1 + relu + linear2 + residual).
    out2d = ln_ffn_residual_pallas(x1_2d, params["ln2_alpha"], params["ln2_beta"],
                                   params["w1"].astype(jnp.bfloat16), params["b1"],
                                   params["w2"].astype(jnp.bfloat16), params["b2"],
                                   eps=eps)
    return out2d.reshape(B, S, D)


# ----------------------------------------------------------------------------
# Pure-JAX reference (mirrors the PyTorch forward semantics exactly, f32)
# ----------------------------------------------------------------------------
def reference_forward(x, src_mask, params, *, eps=1e-6):
    del src_mask  # masked_fill result discarded in the reference -> no-op
    hp = jax.lax.Precision.HIGHEST
    B, S, D = x.shape
    H = params["h"]
    Dk = D // H

    def ln(t, alpha, beta):
        mean = jnp.mean(t, axis=-1, keepdims=True)
        std = jnp.std(t, axis=-1, keepdims=True, ddof=1)
        return alpha * (t - mean) / (std + eps) + beta

    xin = x
    xl = ln(xin, params["ln1_alpha"][0], params["ln1_beta"][0])
    q = jnp.dot(xl, params["wq"], precision=hp) + params["bq"]
    k = jnp.dot(xl, params["wk"], precision=hp) + params["bk"]
    v = jnp.dot(xl, params["wv"], precision=hp) + params["bv"]

    def split(t):
        return t.reshape(B, S, H, Dk).transpose(0, 2, 1, 3)

    qh, kh, vh = split(q), split(k), split(v)
    s = jnp.einsum("bhqd,bhkd->bhqk", qh, kh, precision=hp) / math.sqrt(Dk)
    p = jax.nn.softmax(s, axis=-1)
    o = jnp.einsum("bhqk,bhkd->bhqd", p, vh, precision=hp)
    o = o.transpose(0, 2, 1, 3).reshape(B, S, D)
    x1 = xin + (jnp.dot(o, params["wo"], precision=hp) + params["bo"])

    xl2 = ln(x1, params["ln2_alpha"][0], params["ln2_beta"][0])
    h = jnp.maximum(jnp.dot(xl2, params["w1"], precision=hp) + params["b1"], 0.0)
    x2 = x1 + (jnp.dot(h, params["w2"], precision=hp) + params["b2"])
    return x2


def init_params(key, d_model, dff, h):
    keys = jax.random.split(key, 6)

    def lin(k, fan_in, fan_out):
        kw, kb = jax.random.split(k)
        bound = 1.0 / math.sqrt(fan_in)
        w = jax.random.uniform(kw, (fan_in, fan_out), jnp.float32, -bound, bound)
        b = jax.random.uniform(kb, (fan_out,), jnp.float32, -bound, bound)
        return w, b

    wq, bq = lin(keys[0], d_model, d_model)
    wk, bk = lin(keys[1], d_model, d_model)
    wv, bv = lin(keys[2], d_model, d_model)
    wo, bo = lin(keys[3], d_model, d_model)
    w1, b1 = lin(keys[4], d_model, dff)
    w2, b2 = lin(keys[5], dff, d_model)
    return dict(
        h=h,
        wq=wq, bq=bq, wk=wk, bk=bk, wv=wv, bv=bv, wo=wo, bo=bo,
        w1=w1, b1=b1, w2=w2, b2=b2,
        ln1_alpha=jnp.ones((1,), jnp.float32), ln1_beta=jnp.zeros((1,), jnp.float32),
        ln2_alpha=jnp.ones((1,), jnp.float32), ln2_beta=jnp.zeros((1,), jnp.float32),
    )


if __name__ == "__main__":
    key = jax.random.PRNGKey(0)
    k_p, k_x, k_m = jax.random.split(key, 3)

    batch, seq, d_model, heads, dff = 2, 8, 128, 8, 256
    params = init_params(k_p, d_model, dff, heads)
    x = jax.random.normal(k_x, (batch, seq, d_model), jnp.float32)
    src_mask = (jax.random.uniform(k_m, (batch, 1, seq, seq)) > 0.5).astype(jnp.float32)

    out = encoder_block_forward(x, src_mask, params, eps=1e-6)
    out = jax.block_until_ready(out)

    ref = reference_forward(x, src_mask, params, eps=1e-6)
    err = float(jnp.max(jnp.abs(out - ref)))
    assert out.shape == x.shape
    assert bool(jnp.isfinite(out).all()), "non-finite values in kernel output"
    assert jnp.allclose(out, ref, atol=2e-2, rtol=2e-2), \
        f"mismatch vs reference, max abs err={err}"
    print("KERNEL_OK")
</pallas_src>

<mosaic_0001>
module attributes {stable_mosaic.version = 11 : i64} {
  func.func @_ln_qkv_kernel(%arg0: i32, %arg1: memref<1x1xf32, #tpu.memory_space<smem>>, %arg2: memref<1x1xf32, #tpu.memory_space<smem>>, %arg3: memref<8x128xf32, #tpu.memory_space<vmem>>, %arg4: memref<128x384xbf16, #tpu.memory_space<vmem>>, %arg5: memref<1x384xf32, #tpu.memory_space<vmem>>, %arg6: memref<8x384xbf16, #tpu.memory_space<vmem>>) attributes {dimension_semantics = [#tpu.dimension_semantics<parallel>], iteration_bounds = array<i64: 2>, scalar_prefetch = 0 : i64, scratch_operands = 0 : i64, tpu.core_type = #tpu.core_type<tc>, window_params = [{transform_indices = @transform_0, window_bounds = array<i64: 1, 1>}, {transform_indices = @transform_1, window_bounds = array<i64: 1, 1>}, {transform_indices = @transform_2, window_bounds = array<i64: 8, 128>}, {pipeline_mode = #tpu.pipeline_mode<synchronous>, transform_indices = @transform_3, window_bounds = array<i64: 128, 384>}, {pipeline_mode = #tpu.pipeline_mode<synchronous>, transform_indices = @transform_4, window_bounds = array<i64: 1, 384>}, {transform_indices = @transform_5, window_bounds = array<i64: 8, 384>}]} {
    %c0 = arith.constant 0 : index
    %c0_0 = arith.constant 0 : index
    %0 = vector.load %arg3[%c0, %c0_0] : memref<8x128xf32, #tpu.memory_space<vmem>>, vector<8x128xf32>
    %c0_1 = arith.constant 0 : index
    %c0_2 = arith.constant 0 : index
    %1 = memref.load %arg1[%c0_1, %c0_2] : memref<1x1xf32, #tpu.memory_space<smem>>
    %c0_3 = arith.constant 0 : index
    %c0_4 = arith.constant 0 : index
    %2 = memref.load %arg2[%c0_3, %c0_4] : memref<1x1xf32, #tpu.memory_space<smem>>
    %cst = arith.constant dense<0.000000e+00> : vector<8xf32>
    %3 = vector.multi_reduction <add>, %0, %cst [1] : vector<8x128xf32> to vector<8xf32>
    %4 = vector.shape_cast %3 : vector<8xf32> to vector<8x1xf32>
    %cst_5 = arith.constant 7.812500e-03 : f32
    %5 = vector.broadcast %cst_5 : f32 to vector<8x1xf32>
    %6 = arith.mulf %4, %5 : vector<8x1xf32>
    %7 = vector.broadcast %6 : vector<8x1xf32> to vector<8x128xf32>
    %8 = arith.subf %0, %7 : vector<8x128xf32>
    %9 = arith.mulf %8, %8 : vector<8x128xf32>
    %cst_6 = arith.constant dense<0.000000e+00> : vector<8xf32>
    %10 = vector.multi_reduction <add>, %9, %cst_6 [1] : vector<8x128xf32> to vector<8xf32>
    %11 = vector.shape_cast %10 : vector<8xf32> to vector<8x1xf32>
    %cst_7 = arith.constant 0.00787401571 : f32
    %12 = vector.broadcast %cst_7 : f32 to vector<8x1xf32>
    %13 = arith.mulf %11, %12 : vector<8x1xf32>
    %14 = math.sqrt %13 : vector<8x1xf32>
    %cst_8 = arith.constant 9.99999997E-7 : f32
    %15 = vector.broadcast %cst_8 : f32 to vector<8x1xf32>
    %16 = arith.addf %14, %15 : vector<8x1xf32>
    %17 = tpu.reciprocal %16 {approx = true} : vector<8x1xf32> -> vector<8x1xf32>
    %18 = vector.broadcast %1 : f32 to vector<8x1xf32>
    %19 = arith.mulf %18, %17 : vector<8x1xf32>
    %20 = vector.broadcast %19 : vector<8x1xf32> to vector<8x128xf32>
    %21 = arith.mulf %8, %20 : vector<8x128xf32>
    %22 = vector.broadcast %2 : f32 to vector<8x128xf32>
    %23 = arith.addf %21, %22 : vector<8x128xf32>
    %24 = arith.truncf %23 : vector<8x128xf32> to vector<8x128xbf16>
    %c0_9 = arith.constant 0 : index
    %c0_10 = arith.constant 0 : index
    %25 = vector.load %arg4[%c0_9, %c0_10] : memref<128x384xbf16, #tpu.memory_space<vmem>>, vector<128x384xbf16>
    %cst_11 = arith.constant dense<0.000000e+00> : vector<8x384xf32>
    %26 = tpu.matmul %24, %25, %cst_11 {dimension_numbers = #tpu.dot_dimension_numbers<[1], [0], [0], [1], [0, 0, 1, 1], [], []>} : vector<8x128xbf16>, vector<128x384xbf16>, vector<8x384xf32> -> vector<8x384xf32>
    %c0_12 = arith.constant 0 : index
    %c0_13 = arith.constant 0 : index
    %27 = vector.load %arg5[%c0_12, %c0_13] : memref<1x384xf32, #tpu.memory_space<vmem>>, vector<1x384xf32>
    %28 = vector.broadcast %27 : vector<1x384xf32> to vector<8x384xf32>
    %29 = arith.addf %26, %28 : vector<8x384xf32>
    %30 = arith.truncf %29 : vector<8x384xf32> to vector<8x384xbf16>
    %c0_14 = arith.constant 0 : index
    %c0_15 = arith.constant 0 : index
    %31 = vector.load %arg6[%c0_14, %c0_15] : memref<8x384xbf16, #tpu.memory_space<vmem>>, vector<8x384xbf16>
    tpu.vector_store %arg6[%c0_14, %c0_15], %30 {strides = array<i32>} : memref<8x384xbf16, #tpu.memory_space<vmem>>, vector<8x384xbf16>,
    return
  }
  func.func @transform_0(%arg0: i32) -> (i32, i32) {
    %c0_i32 = arith.constant 0 : i32
    %c0_i32_0 = arith.constant 0 : i32
    %c0_i32_1 = arith.constant 0 : i32
    return %c0_i32, %c0_i32_0 : i32, i32
  }
  func.func @transform_1(%arg0: i32) -> (i32, i32) {
    %c0_i32 = arith.constant 0 : i32
    %c0_i32_0 = arith.constant 0 : i32
    %c0_i32_1 = arith.constant 0 : i32
    return %c0_i32, %c0_i32_0 : i32, i32
  }
  func.func @transform_2(%arg0: i32) -> (i32, i32) {
    %c0_i32 = arith.constant 0 : i32
    %c0_i32_0 = arith.constant 0 : i32
    return %arg0, %c0_i32 : i32, i32
  }
  func.func @transform_3(%arg0: i32) -> (i32, i32) {
    %c0_i32 = arith.constant 0 : i32
    %c0_i32_0 = arith.constant 0 : i32
    %c0_i32_1 = arith.constant 0 : i32
    return %c0_i32, %c0_i32_0 : i32, i32
  }
  func.func @transform_4(%arg0: i32) -> (i32, i32) {
    %c0_i32 = arith.constant 0 : i32
    %c0_i32_0 = arith.constant 0 : i32
    %c0_i32_1 = arith.constant 0 : i32
    return %c0_i32, %c0_i32_0 : i32, i32
  }
  func.func @transform_5(%arg0: i32) -> (i32, i32) {
    %c0_i32 = arith.constant 0 : i32
    %c0_i32_0 = arith.constant 0 : i32
    return %arg0, %c0_i32 : i32, i32
  }
}

</mosaic_0001>

<llo_original>
// kernel: tpu_custom_call.1
$region0: #{tpu_custom_call.1}
  #allocation0 [shape = 'u32[]', space=smem, size = 0x4, offset = 0x4, fixed_abs, tag = 'smem constant byte address 0x4 - core index']
  #allocation1 [shape = 'u32[144,128]{1,0:T(1,128)}', space=vmem, size = 0x12000, scoped, tag = 'internal scratch']
  #allocation2 [shape = 'f32[1,1]{1,0:T(1,128)S(6)}', space=smem, size = 0x200, scoped, tag = 'scoped memory for tpu_custom_call.1']
  #allocation3 [shape = 'f32[1,1]{1,0:T(1,128)S(6)}', space=smem, size = 0x200, scoped, tag = 'scoped memory for tpu_custom_call.1']
  %s0 = inlined_call_operand.<no memory space> [shape: f32[1,1], index: 0, kind: input, shape index: {}]
  %s1 = inlined_call_operand.<no memory space> [shape: f32[1,1], index: 1, kind: input, shape index: {}]
  %s2 = inlined_call_operand.hbm [shape: f32[16,128], index: 2, kind: input, shape index: {}]
  %s3 = inlined_call_operand.hbm [shape: bf16[128,384], index: 3, kind: input, shape index: {}]
  %s4 = inlined_call_operand.vmem [shape: f32[1,384], index: 4, kind: input, shape index: {}]
  %s5 = inlined_call_operand.hbm [shape: bf16[16,384], index: 5, kind: output, shape index: {}]
  %s6 = sld [smem:[#allocation0]]
  $region61: #{tpu_custom_call.1} parent=0
    _
  %s8 = ssub.s32 1, %s6
  %s9 = scalar_select 0, %s8, %s6
  %10 = sst [smem:[#allocation2]] %s0
  %11 = sst [smem:[#allocation3]] %s1
  $region1: #{tpu_custom_call.1} parent=0
    #allocation4 [shape = 'u8[8192]{0}', space=vmem, size = 0x2000, scoped, tag = 'input window, operand 2']
    #allocation5 [shape = 's32[2]{0}', space=sflag, size = 0x8, scoped, tag = 'scoped memory for tpu_custom_call.1']
    #allocation6 [shape = 's32[2]{0}', space=sflag, size = 0x8, scoped, tag = 'scoped memory for tpu_custom_call.1']
    #allocation7 [shape = 'u8[98304]{0}', space=vmem, size = 0x18000, scoped, tag = 'input window, operand 3, single buffered']
    #allocation8 [shape = 's32[1]{0}', space=sflag, size = 0x4, scoped, tag = 'scoped memory for tpu_custom_call.1']
    #allocation9 [shape = 'u8[12288]{0}', space=vmem, size = 0x3000, scoped, tag = 'output window, operand 0']
    %12 = vsyncpa [#allocation5], 0
    %s13 = scalar_lea.sflag [#allocation5], 1
    %14 = vsyncpa %s13, 0
    %15 = vsyncpa [#allocation8], 0
    %16 = vsyncpa [#allocation6], 0
    %s17 = scalar_lea.sflag [#allocation6], 1
    %18 = vsyncpa %s17, 0
    loop: start=0, step=1, limit=4
    $region2: #{tpu_custom_call.1} parent=1 // loop_pre_header
      _
    $region3: #{tpu_custom_call.1} parent=1 // loop_header
      %s20 = sphi 0, %s24
      %p21 = scmp.ge.s32.totalorder %s20, 4
      %s28 = sphi 0, %s28
      %s30 = sphi 0, %s28
      %s31 = sphi 0, %s30
      %s45 = sphi 0, %s31
      %s49 = sphi 0, %s49
      %s51 = sphi 0, %s49
      %s52 = sphi 0, %s51
      %s66 = sphi 0, %s52
      %s72 = sphi 0, %s74
      %s75 = sphi 0, %s72
      %s76 = sphi 0, %s75
      %s92 = sphi 0, %s76
      %s96 = sphi 0, %s96
      %s98 = sphi 0, %s96
      %s99 = sphi 0, %s98
      %s113 = sphi 0, %s99
      %s117 = sphi 0, %s117
      %s119 = sphi 0, %s117
      %s120 = sphi 0, %s119
      %s134 = sphi 0, %s120
      %s140 = sphi 0, %s142
      %s143 = sphi 0, %s140
      %s144 = sphi 0, %s143
      %s160 = sphi 0, %s144
    $region4: #{tpu_custom_call.1} parent=1 // loop_header_branch
      %23 = sbr.rel (%p21) target = $region8
    $region5: #{tpu_custom_call.1} parent=1 // loop_body
      %s25 = ssub.s32 %s20, 1
      %s26 = ssub.s32 %s20, 2
      %s27 = sadd.s32 %s20, 1
      %s29 = sadd.s32 %s28, 1
      %p32 = scmp.eq.s32.totalorder %s20, 1
      %p33 = scmp.ne.s32.totalorder %s28, %s30
      %p34 = scmp.eq.s32.totalorder %s20, 0
      %p35 = por %p33, %p34
      %p36 = scmp.ne.s32.totalorder %s28, %s30
      %p37 = scmp.eq.s32.totalorder %s25, 1
      %p38 = por %p36, %p37
      %p39 = scmp.ne.s32.totalorder %s30, %s31
      %p40 = scmp.eq.s32.totalorder %s25, 0
      %p41 = por %p39, %p40
      %p42 = scmp.ne.s32.totalorder %s30, %s31
      %p43 = scmp.eq.s32.totalorder %s26, 1
      %p44 = por %p42, %p43
      %p46 = scmp.ne.s32.totalorder %s31, %s45
      %p47 = scmp.eq.s32.totalorder %s26, 0
      %p48 = por %p46, %p47
      %s50 = sadd.s32 %s49, 1
      %p53 = scmp.eq.s32.totalorder %s20, 1
      %p54 = scmp.ne.s32.totalorder %s49, %s51
      %p55 = scmp.eq.s32.totalorder %s20, 0
      %p56 = por %p54, %p55
      %p57 = scmp.ne.s32.totalorder %s49, %s51
      %p58 = scmp.eq.s32.totalorder %s25, 1
      %p59 = por %p57, %p58
      %p60 = scmp.ne.s32.totalorder %s51, %s52
      %p61 = scmp.eq.s32.totalorder %s25, 0
      %p62 = por %p60, %p61
      %p63 = scmp.ne.s32.totalorder %s51, %s52
      %p64 = scmp.eq.s32.totalorder %s26, 1
      %p65 = por %p63, %p64
      %p67 = scmp.ne.s32.totalorder %s52, %s66
      %p68 = scmp.eq.s32.totalorder %s26, 0
      %p69 = por %p67, %p68
      %s70 = ssub.s32 %s20, %s27
      %p71 = scmp.eq.s32.totalorder %s70, 0
      %s73 = sadd.s32 %s72, 1
      %s74 = scalar_select %p71, %s72, %s73
      %p77 = pneg %p71
      %p78 = scmp.eq.s32.totalorder %s20, 1
      %p79 = por %p77, %p78
      %p80 = scmp.ne.s32.totalorder %s72, %s75
      %p81 = scmp.eq.s32.totalorder %s20, 0
      %p82 = por %p80, %p81
      %p83 = scmp.ne.s32.totalorder %s72, %s75
      %p84 = scmp.eq.s32.totalorder %s25, 1
      %p85 = por %p83, %p84
      %p86 = scmp.ne.s32.totalorder %s75, %s76
      %p87 = scmp.eq.s32.totalorder %s25, 0
      %p88 = por %p86, %p87
      %p89 = scmp.ne.s32.totalorder %s75, %s76
      %p90 = scmp.eq.s32.totalorder %s26, 1
      %p91 = por %p89, %p90
      %p93 = scmp.ne.s32.totalorder %s76, %s92
      %p94 = scmp.eq.s32.totalorder %s26, 0
      %p95 = por %p93, %p94
      %s97 = sadd.s32 %s96, 1
      %p100 = scmp.eq.s32.totalorder %s20, 1
      %p101 = scmp.ne.s32.totalorder %s96, %s98
      %p102 = scmp.eq.s32.totalorder %s20, 0
      %p103 = por %p101, %p102
      %p104 = scmp.ne.s32.totalorder %s96, %s98
      %p105 = scmp.eq.s32.totalorder %s25, 1
      %p106 = por %p104, %p105
      %p107 = scmp.ne.s32.totalorder %s98, %s99
      %p108 = scmp.eq.s32.totalorder %s25, 0
      %p109 = por %p107, %p108
      %p110 = scmp.ne.s32.totalorder %s98, %s99
      %p111 = scmp.eq.s32.totalorder %s26, 1
      %p112 = por %p110, %p111
      %p114 = scmp.ne.s32.totalorder %s99, %s113
      %p115 = scmp.eq.s32.totalorder %s26, 0
      %p116 = por %p114, %p115
      %s118 = sadd.s32 %s117, 1
      %p121 = scmp.eq.s32.totalorder %s20, 1
      %p122 = scmp.ne.s32.totalorder %s117, %s119
      %p123 = scmp.eq.s32.totalorder %s20, 0
      %p124 = por %p122, %p123
      %p125 = scmp.ne.s32.totalorder %s117, %s119
      %p126 = scmp.eq.s32.totalorder %s25, 1
      %p127 = por %p125, %p126
      %p128 = scmp.ne.s32.totalorder %s119, %s120
      %p129 = scmp.eq.s32.totalorder %s25, 0
      %p130 = por %p128, %p129
      %p131 = scmp.ne.s32.totalorder %s119, %s120
      %p132 = scmp.eq.s32.totalorder %s26, 1
      %p133 = por %p131, %p132
      %p135 = scmp.ne.s32.totalorder %s120, %s134
      %p136 = scmp.eq.s32.totalorder %s26, 0
      %p137 = por %p135, %p136
      %s138 = ssub.s32 %s20, %s27
      %p139 = scmp.eq.s32.totalorder %s138, 0
      %s141 = sadd.s32 %s140, 1
      %s142 = scalar_select %p139, %s140, %s141
      %p145 = pneg %p139
      %p146 = scmp.eq.s32.totalorder %s20, 1
      %p147 = por %p145, %p146
      %p148 = scmp.ne.s32.totalorder %s140, %s143
      %p149 = scmp.eq.s32.totalorder %s20, 0
      %p150 = por %p148, %p149
      %p151 = scmp.ne.s32.totalorder %s140, %s143
      %p152 = scmp.eq.s32.totalorder %s25, 1
      %p153 = por %p151, %p152
      %p154 = scmp.ne.s32.totalorder %s143, %s144
      %p155 = scmp.eq.s32.totalorder %s25, 0
      %p156 = por %p154, %p155
      %p157 = scmp.ne.s32.totalorder %s143, %s144
      %p158 = scmp.eq.s32.totalorder %s26, 1
      %p159 = por %p157, %p158
      %p161 = scmp.ne.s32.totalorder %s144, %s160
      %p162 = scmp.eq.s32.totalorder %s26, 0
      %p163 = por %p161, %p162
      %p164 = scmp.le.s32.totalorder 1, %s20
      %p165 = scmp.lt.s32.totalorder %s20, 3
      %p166 = pnand %p164, %p165
      %p167 = pneg %p166
      // Predicated region
      $region9: #{tpu_custom_call.1} parent=5 // pred_check
        _
      $region10: #{tpu_custom_call.1} parent=5 // pred_check_branch
        %169 = sbr.rel (%p166) target = $region12
      $region11: #{tpu_custom_call.1} parent=5 // pred_region
        %s170 = ssub.s32 %s20, 1
        // Predicated region
        $region13: #{tpu_custom_call.1} parent=11 // pred_check
          %p171 = pneg %p41
        $region14: #{tpu_custom_call.1} parent=11 // pred_check_branch
          %173 = sbr.rel (%p171) target = $region16
        $region15: #{tpu_custom_call.1} parent=11 // pred_region
          _
        $region16: #{tpu_custom_call.1} parent=11 // pred_fallthru
          _
        // Predicated region
        $region17: #{tpu_custom_call.1} parent=11 // pred_check
          %p174 = pneg %p62
        $region18: #{tpu_custom_call.1} parent=11 // pred_check_branch
          %176 = sbr.rel (%p174) target = $region20
        $region19: #{tpu_custom_call.1} parent=11 // pred_region
          _
        $region20: #{tpu_custom_call.1} parent=11 // pred_fallthru
          _
        // Predicated region
        $region21: #{tpu_custom_call.1} parent=11 // pred_check
          %p177 = pneg %p109
        $region22: #{tpu_custom_call.1} parent=11 // pred_check_branch
          %179 = sbr.rel (%p177) target = $region24
        $region23: #{tpu_custom_call.1} parent=11 // pred_region
          %s181 = ssub.s32 3072, 3072
          %182 = vsyncadd [#allocation8], %s181
          %s183 = sshll.u32 [#allocation7], 4
          %s184 = int_to_ptr.vmem [resolvable:$true] %s183
          %189 = dma.hbm_to_vmem [thread:$0]  %s3, 3072, %s184, [#allocation8], 192, 192, 12
        $region24: #{tpu_custom_call.1} parent=11 // pred_fallthru
          _
        // Predicated region
        $region25: #{tpu_custom_call.1} parent=11 // pred_check
          %p190 = pneg %p130
        $region26: #{tpu_custom_call.1} parent=11 // pred_check_branch
          %192 = sbr.rel (%p190) target = $region28
        $region27: #{tpu_custom_call.1} parent=11 // pred_region
          _
        $region28: #{tpu_custom_call.1} parent=11 // pred_fallthru
          _
      $region12: #{tpu_custom_call.1} parent=5 // pred_fallthru
        _
      %p193 = scmp.lt.s32.totalorder %s20, 2
      // Predicated region
      $region29: #{tpu_custom_call.1} parent=5 // pred_check
        %p194 = pneg %p193
      $region30: #{tpu_custom_call.1} parent=5 // pred_check_branch
        %196 = sbr.rel (%p194) target = $region32
      $region31: #{tpu_custom_call.1} parent=5 // pred_region
        // Predicated region
        $region33: #{tpu_custom_call.1} parent=31 // pred_check
          %p197 = pneg %p82
        $region34: #{tpu_custom_call.1} parent=31 // pred_check_branch
          %199 = sbr.rel (%p197) target = $region36
        $region35: #{tpu_custom_call.1} parent=31 // pred_region
          %s200 = sand.u32 %s72, 1
          %s201 = scalar_lea.sflag [#allocation5], %s200
          %s202 = sand.u32 %s72, 1
          %s203 = smul.addr %s202, 8
          %s204 = scalar_lea.vmem [#allocation4], %s203
          %s206 = ssub.s32 128, 128
          %207 = vsyncadd %s201, %s206
          %s208 = smul.addr %s20, 128
          %s209 = scalar_lea.hbm %s2, %s208
          %s211 = sshll.u32 %s204, 4
          %s212 = int_to_ptr.vmem [resolvable:$true] %s211
          %214 = dma.hbm_to_vmem [thread:$0]  %s209, 128, %s212, %s201
        $region36: #{tpu_custom_call.1} parent=31 // pred_fallthru
          _
      $region32: #{tpu_custom_call.1} parent=5 // pred_fallthru
        _
      %p215 = scmp.le.s32.totalorder 1, %s20
      %p216 = scmp.lt.s32.totalorder %s20, 3
      %p217 = pnand %p215, %p216
      %p218 = pneg %p217
      // Predicated region
      $region37: #{tpu_custom_call.1} parent=5 // pred_check
        _
      $region38: #{tpu_custom_call.1} parent=5 // pred_check_branch
        %220 = sbr.rel (%p217) target = $region40
      $region39: #{tpu_custom_call.1} parent=5 // pred_region
        %s221 = ssub.s32 %s20, 1
        %s222 = sand.u32 %s75, 1
        %s223 = scalar_lea.sflag [#allocation5], %s222
        %s224 = sand.u32 %s75, 1
        %s225 = smul.addr %s224, 8
        %s226 = scalar_lea.vmem [#allocation4], %s225
        // Predicated region
        $region41: #{tpu_custom_call.1} parent=39 // pred_check
          %p227 = pneg %p88
        $region42: #{tpu_custom_call.1} parent=39 // pred_check_branch
          %229 = sbr.rel (%p227) target = $region44
        $region43: #{tpu_custom_call.1} parent=39 // pred_region
          %230 = dma.done %s223, 128
        $region44: #{tpu_custom_call.1} parent=39 // pred_fallthru
          _
        // Predicated region
        $region45: #{tpu_custom_call.1} parent=39 // pred_check
          %p231 = pneg %p109
        $region46: #{tpu_custom_call.1} parent=39 // pred_check_branch
          %233 = sbr.rel (%p231) target = $region48
        $region47: #{tpu_custom_call.1} parent=39 // pred_region
          %234 = dma.done [#allocation8], 3072
        $region48: #{tpu_custom_call.1} parent=39 // pred_fallthru
          _
        %p235 = pneg %p41
        %p236 = pneg %p38
        %p237 = pneg %p62
        %p238 = pneg %p59
        %s239 = sand.u32 %s75, 1
        %s240 = scalar_lea.sflag [#allocation5], %s239
        %s241 = sand.u32 %s75, 1
        %s242 = smul.addr %s241, 8
        %s243 = scalar_lea.vmem [#allocation4], %s242
        %p244 = pneg %p88
        %p245 = pneg %p85
        %p246 = pneg %p109
        %p247 = pneg %p106
        %p248 = pneg %p130
        %p249 = pneg %p127
        %p250 = pneg %p156
        %p251 = pneg %p153
        %s252 = sand.u32 %s143, 1
        %s253 = scalar_lea.sflag [#allocation6], %s252
        %s254 = sand.u32 %s143, 1
        %s255 = smul.addr %s254, 12
        %s256 = scalar_lea.vmem [#allocation9], %s255
        %v258 = vld [vmem:[%s226] sm:$0xff]
        %s259 = sld [smem:[#allocation2]]
        %s260 = sld [smem:[#allocation3]]
        %261 = vadd.xlane.f32.xlu0 %v258
        %v262 = vpop.xlane.xlu0 %261
        %v263 = vmul.f32 %v262, 0.0078125
        %v264 = vsub.f32 %v258, %v263
        %v265 = vmul.f32 %v264, %v264
        %266 = vadd.xlane.f32.xlu0 %v265
        %v267 = vpop.xlane.xlu0 %266
        %v268 = vmul.f32 %v267, 0.007874016
        %v269 = vrsqrt.pop %v268
        %v270 = vmul.f32 %v268, %v269
        %vm271 = vcmp.eq.f32.partialorder %v268, inf
        %v272 = vsel %vm271, %v268, %v270
        %vm273 = vcmp.eq.f32.partialorder %v268, 0.0
        %v274 = vand.u32 %v268, 2147483648
        %v275 = vsel %vm273, %v274, %v272
        %v276 = vadd.f32 %v275, 1e-06
        %v277 = vrcp.pop %v276
        %v278 = vstv %s259
        %v279 = vmul.f32 %v278, %v277
        %v280 = vmul.f32 %v264, %v279
        %v281 = vstv %s260
        %v282 = vadd.f32 %v280, %v281
        %v283 = vpack.c.bf16 %v282, %v282
        %v284 = vld [vmem:[#allocation7] sm:$0xff]
        %v285 = vld [vmem:[#allocation7 + $0x8] sm:$0xf]
        %v286 = vld [vmem:[#allocation7 + $0xc] sm:$0xff]
        %v287 = vld [vmem:[#allocation7 + $0x14] sm:$0xf]
        %v288 = vld [vmem:[#allocation7 + $0x18] sm:$0xff]
        %v289 = vld [vmem:[#allocation7 + $0x20] sm:$0xf]
        %v290 = vld [vmem:[#allocation7 + $0x24] sm:$0xff]
        %v291 = vld [vmem:[#allocation7 + $0x2c] sm:$0xf]
        %v292 = vld [vmem:[#allocation7 + $0x30] sm:$0xff]
        %v293 = vld [vmem:[#allocation7 + $0x38] sm:$0xf]
        %v294 = vld [vmem:[#allocation7 + $0x3c] sm:$0xff]
        %v295 = vld [vmem:[#allocation7 + $0x44] sm:$0xf]
        %v296 = vld [vmem:[#allocation7 + $0x48] sm:$0xff]
        %v297 = vld [vmem:[#allocation7 + $0x50] sm:$0xf]
        %v298 = vld [vmem:[#allocation7 + $0x54] sm:$0xff]
        %v299 = vld [vmem:[#allocation7 + $0x5c] sm:$0xf]
        %v300 = vld [vmem:[#allocation7 + $0x60] sm:$0xff]
        %v301 = vld [vmem:[#allocation7 + $0x68] sm:$0xf]
        %v302 = vld [vmem:[#allocation7 + $0x6c] sm:$0xff]
        %v303 = vld [vmem:[#allocation7 + $0x74] sm:$0xf]
        %v304 = vld [vmem:[#allocation7 + $0x78] sm:$0xff]
        %v305 = vld [vmem:[#allocation7 + $0x80] sm:$0xf]
        %v306 = vld [vmem:[#allocation7 + $0x84] sm:$0xff]
        %v307 = vld [vmem:[#allocation7 + $0x8c] sm:$0xf]
        %v308 = vld [vmem:[#allocation7 + $0x90] sm:$0xff]
        %v309 = vld [vmem:[#allocation7 + $0x98] sm:$0xf]
        %v310 = vld [vmem:[#allocation7 + $0x9c] sm:$0xff]
        %v311 = vld [vmem:[#allocation7 + $0xa4] sm:$0xf]
        %v312 = vld [vmem:[#allocation7 + $0xa8] sm:$0xff]
        %v313 = vld [vmem:[#allocation7 + $0xb0] sm:$0xf]
        %v314 = vld [vmem:[#allocation7 + $0xb4] sm:$0xff]
        %v315 = vld [vmem:[#allocation7 + $0xbc] sm:$0xf]
        %v316 = vld [vmem:[%s4] sm:$0x7]
        %v318 = vlaneseq
        %v319 = vshrl.u32 %v318, 7
        %v320 = vsub.s32 0, %v319
        %v321 = vrot.slane %v316, %v320
        %v322 = vlaneseq
        %v323 = vshrl.u32 %v322, 7
        %v324 = vsub.s32 1, %v323
        %v325 = vrot.slane %v316, %v324
        %v326 = vlaneseq
        %v327 = vshrl.u32 %v326, 7
        %v328 = vsub.s32 2, %v327
        %v329 = vrot.slane %v316, %v328
        %v365 = vunpack.c.l.b16 %v284
        %v366 = vunpack.c.h.b16 %v284
        %v367 = vunpack.c.l.b16 %v285
        %v368 = vunpack.c.l.b16 %v286
        %v369 = vunpack.c.h.b16 %v286
        %v370 = vunpack.c.l.b16 %v287
        %v371 = vunpack.c.l.b16 %v288
        %v372 = vunpack.c.h.b16 %v288
        %v373 = vunpack.c.l.b16 %v289
        %v374 = vunpack.c.l.b16 %v290
        %v375 = vunpack.c.h.b16 %v290
        %v376 = vunpack.c.l.b16 %v291
        %v377 = vunpack.c.l.b16 %v292
        %v378 = vunpack.c.h.b16 %v292
        %v379 = vunpack.c.l.b16 %v293
        %v380 = vunpack.c.l.b16 %v294
        %v381 = vunpack.c.h.b16 %v294
        %v382 = vunpack.c.l.b16 %v295
        %v383 = vunpack.c.l.b16 %v296
        %v384 = vunpack.c.h.b16 %v296
        %v385 = vunpack.c.l.b16 %v297
        %v386 = vunpack.c.l.b16 %v298
        %v387 = vunpack.c.h.b16 %v298
        %v388 = vunpack.c.l.b16 %v299
        %v389 = vunpack.c.l.b16 %v300
        %v390 = vunpack.c.h.b16 %v300
        %v391 = vunpack.c.l.b16 %v301
        %v392 = vunpack.c.l.b16 %v302
        %v393 = vunpack.c.h.b16 %v302
        %v394 = vunpack.c.l.b16 %v303
        %v395 = vunpack.c.l.b16 %v304
        %v396 = vunpack.c.h.b16 %v304
        %v397 = vunpack.c.l.b16 %v305
        %v398 = vunpack.c.l.b16 %v306
        %v399 = vunpack.c.h.b16 %v306
        %v400 = vunpack.c.l.b16 %v307
        %v401 = vunpack.c.l.b16 %v308
        %v402 = vunpack.c.h.b16 %v308
        %v403 = vunpack.c.l.b16 %v309
        %v404 = vunpack.c.l.b16 %v310
        %v405 = vunpack.c.h.b16 %v310
        %v406 = vunpack.c.l.b16 %v311
        %v407 = vunpack.c.l.b16 %v312
        %v408 = vunpack.c.h.b16 %v312
        %v409 = vunpack.c.l.b16 %v313
        %v410 = vunpack.c.l.b16 %v314
        %v411 = vunpack.c.h.b16 %v314
        %v412 = vunpack.c.l.b16 %v315
        %v413 = vpack.c.b16 %v368, %v365
        %v414 = vpack.c.b16 %v369, %v366
        %v415 = vpack.c.b16 %v370, %v367
        %v416 = vpack.c.b16 %v374, %v371
        %v417 = vpack.c.b16 %v375, %v372
        %v418 = vpack.c.b16 %v376, %v373
        %v419 = vpack.c.b16 %v380, %v377
        %v420 = vpack.c.b16 %v381, %v378
        %v421 = vpack.c.b16 %v382, %v379
        %v422 = vpack.c.b16 %v386, %v383
        %v423 = vpack.c.b16 %v387, %v384
        %v424 = vpack.c.b16 %v388, %v385
        %v425 = vpack.c.b16 %v392, %v389
        %v426 = vpack.c.b16 %v393, %v390
        %v427 = vpack.c.b16 %v394, %v391
        %v428 = vpack.c.b16 %v398, %v395
        %v429 = vpack.c.b16 %v399, %v396
        %v430 = vpack.c.b16 %v400, %v397
        %v431 = vpack.c.b16 %v404, %v401
        %v432 = vpack.c.b16 %v405, %v402
        %v433 = vpack.c.b16 %v406, %v403
        %v434 = vpack.c.b16 %v410, %v407
        %v435 = vpack.c.b16 %v411, %v408
        %v436 = vpack.c.b16 %v412, %v409
        %461 = vmatprep.subr.bf16.mxu0 %v414
        %462 = vmatpush1.bf16.msra.mxu0 %v413
        %463 = vmatprep.subr.bf16.mxu0 %v417
        %464 = vmatpush1.bf16.msra.mxu0 %v416
        %465 = vmatprep.subr.bf16.mxu0 %v420
        %466 = vmatpush1.bf16.msra.mxu0 %v419
        %467 = vmatprep.subr.bf16.mxu0 %v423
        %468 = vmatpush1.bf16.msra.mxu0 %v422
        %469 = vmatprep.subr.bf16.mxu0 %v426
        %470 = vmatpush1.bf16.msra.mxu0 %v425
        %471 = vmatprep.subr.bf16.mxu0 %v429
        %472 = vmatpush1.bf16.msra.mxu0 %v428
        %473 = vmatprep.subr.bf16.mxu0 %v432
        %474 = vmatpush1.bf16.msra.mxu0 %v431
        %475 = vmatprep.subr.bf16.mxu0 %v435
        %476 = vmatpush1.bf16.msra.mxu0 %v434
        %477 = vmatprep.subr.bf16.mxu0 0
        %478 = vmatpush1.bf16.msra.mxu0 0
        %479 = vmatprep.subr.bf16.mxu0 0
        %480 = vmatpush1.bf16.msra.mxu0 0
        %481 = vmatprep.subr.bf16.mxu0 0
        %482 = vmatpush1.bf16.msra.mxu0 0
        %483 = vmatprep.subr.bf16.mxu0 0
        %484 = vmatpush1.bf16.msra.mxu0 0
        %485 = vmatprep.subr.bf16.mxu0 0
        %486 = vmatpush1.bf16.msra.mxu0 0
        %487 = vmatprep.subr.bf16.mxu0 0
        %488 = vmatpush1.bf16.msra.mxu0 0
        %489 = vmatprep.subr.bf16.mxu0 0
        %490 = vmatpush1.bf16.msra.mxu0 0
        %491 = vmatprep.subr.bf16.mxu0 0
        %492 = vmatpush1.bf16.msra.mxu0 0
        %493 = vmatprep.mubr.bf16.mxu0 0
        %494 = vmatmul.mubr.bf16.gmra.mrb[0].mxu0 %v283
        %v495 = vpop.f32.mrb[0].mxu0
        %v496 = vadd.f32 %v321, %v495
        %v497 = vpop.f32.mrb[0].mxu0
        %v498 = vadd.f32 %v325, %v497
        %v499 = vpop.f32.mrb[0].mxu0
        %v500 = vpop.f32.mrb[0].mxu0
        %501 = vdwg.mxu0
        %502 = vmatprep.subr.bf16.mxu0 0
        %503 = vmatpush1.bf16.msra.mxu0 %v415
        %504 = vmatprep.subr.bf16.mxu0 0
        %505 = vmatpush1.bf16.msra.mxu0 %v418
        %506 = vmatprep.subr.bf16.mxu0 0
        %507 = vmatpush1.bf16.msra.mxu0 %v421
        %508 = vmatprep.subr.bf16.mxu0 0
        %509 = vmatpush1.bf16.msra.mxu0 %v424
        %510 = vmatprep.subr.bf16.mxu0 0
        %511 = vmatpush1.bf16.msra.mxu0 %v427
        %512 = vmatprep.subr.bf16.mxu0 0
        %513 = vmatpush1.bf16.msra.mxu0 %v430
        %514 = vmatprep.subr.bf16.mxu0 0
        %515 = vmatpush1.bf16.msra.mxu0 %v433
        %516 = vmatprep.subr.bf16.mxu0 0
        %517 = vmatpush1.bf16.msra.mxu0 %v436
        %518 = vmatprep.subr.bf16.mxu0 0
        %519 = vmatpush1.bf16.msra.mxu0 0
        %520 = vmatprep.subr.bf16.mxu0 0
        %521 = vmatpush1.bf16.msra.mxu0 0
        %522 = vmatprep.subr.bf16.mxu0 0
        %523 = vmatpush1.bf16.msra.mxu0 0
        %524 = vmatprep.subr.bf16.mxu0 0
        %525 = vmatpush1.bf16.msra.mxu0 0
        %526 = vmatprep.subr.bf16.mxu0 0
        %527 = vmatpush1.bf16.msra.mxu0 0
        %528 = vmatprep.subr.bf16.mxu0 0
        %529 = vmatpush1.bf16.msra.mxu0 0
        %530 = vmatprep.subr.bf16.mxu0 0
        %531 = vmatpush1.bf16.msra.mxu0 0
        %532 = vmatprep.subr.bf16.mxu0 0
        %533 = vmatpush1.bf16.msra.mxu0 0
        %534 = vmatprep.mubr.bf16.mxu0 0
        %535 = vmatmul.mubr.bf16.gmra.mrb[0].mxu0 %v283
        %v536 = vpop.f32.mrb[0].mxu0
        %v537 = vadd.f32 %v329, %v536
        %v538 = vpop.f32.mrb[0].mxu0
        %v539 = vpop.f32.mrb[0].mxu0
        %v540 = vpop.f32.mrb[0].mxu0
        %541 = vdwg.mxu0
        %v542 = vpack.c.bf16 %v496, %v496
        %v543 = vpack.c.bf16 %v498, %v498
        %v544 = vpack.c.bf16 %v537, %v537
        %v548 = vunpack.c.l.b16 %v542
        %v549 = vunpack.c.l.b16 %v543
        %v550 = vunpack.c.l.b16 %v544
        %v551 = vpack.c.b16 %v549, %v548
        %v552 = vpack.c.b16 %v550, %v550
        %555 = vst [vmem:[%s256] sm:$0xff] %v551
        %556 = vst [vmem:[%s256 + $0x8] sm:$0xf] %v552
        %s557 = sand.u32 %s143, 1
        %s558 = scalar_lea.sflag [#allocation6], %s557
        %s559 = sand.u32 %s143, 1
        %s560 = smul.addr %s559, 12
        %s561 = scalar_lea.vmem [#allocation9], %s560
        // Predicated region
        $region49: #{tpu_custom_call.1} parent=39 // pred_check
          %p562 = pneg %p153
        $region50: #{tpu_custom_call.1} parent=39 // pred_check_branch
          %564 = sbr.rel (%p562) target = $region52
        $region51: #{tpu_custom_call.1} parent=39 // pred_region
          %s566 = ssub.s32 192, 192
          %567 = vsyncadd %s558, %s566
          %s568 = smul.addr %s25, 3
          %s569 = smul.addr %s568, 64
          %s570 = scalar_lea.hbm %s5, %s569
          %s572 = sshll.u32 %s561, 4
          %s573 = int_to_ptr.vmem [resolvable:$true] %s572
          %575 = dma.vmem_to_hbm [thread:$0]  %s573, 192, %s570, %s558
        $region52: #{tpu_custom_call.1} parent=39 // pred_fallthru
          _
      $region40: #{tpu_custom_call.1} parent=5 // pred_fallthru
        _
      %p576 = scmp.le.s32.totalorder 2, %s20
      // Predicated region
      $region53: #{tpu_custom_call.1} parent=5 // pred_check
        %p577 = pneg %p576
      $region54: #{tpu_custom_call.1} parent=5 // pred_check_branch
        %579 = sbr.rel (%p577) target = $region56
      $region55: #{tpu_custom_call.1} parent=5 // pred_region
        %s580 = ssub.s32 %s20, 2
        // Predicated region
        $region57: #{tpu_custom_call.1} parent=55 // pred_check
          %p581 = pneg %p159
        $region58: #{tpu_custom_call.1} parent=55 // pred_check_branch
          %583 = sbr.rel (%p581) target = $region60
        $region59: #{tpu_custom_call.1} parent=55 // pred_region
          %s584 = sand.u32 %s144, 1
          %s585 = scalar_lea.sflag [#allocation6], %s584
          %s586 = sand.u32 %s144, 1
          %s587 = smul.addr %s586, 12
          %s588 = scalar_lea.vmem [#allocation9], %s587
          %589 = dma.done %s585, 192
        $region60: #{tpu_custom_call.1} parent=55 // pred_fallthru
          _
      $region56: #{tpu_custom_call.1} parent=5 // pred_fallthru
        _
    $region6: #{tpu_custom_call.1} parent=1 // loop_footer
      %s24 = sadd.s32 1, %s20
    $region7: #{tpu_custom_call.1} parent=1 // loop_footer_branch
      %19 = sbr.rel target = $region3
    $region8: #{tpu_custom_call.1} parent=1 // loop_exit
      _
    %590 = vsyncpa [#allocation5], 1
    %s591 = scalar_lea.sflag [#allocation5], 1
    %592 = vsyncpa %s591, 1
    %593 = vsyncpa [#allocation8], 1
    %594 = vsyncpa [#allocation6], 1
    %s595 = scalar_lea.sflag [#allocation6], 1
    %596 = vsyncpa %s595, 1

</llo_original>
